<compile_context>
chip_gen: v6e
topology: v6e:2x2x1
jax: 0.10.0
libtpu: 0.0.40
codegen_flags: <defaults>
</compile_context>

<pallas_src>
import functools

import jax
import jax.numpy as jnp
from jax.experimental import pallas as pl
from jax.experimental.pallas import tpu as pltpu


# ~2 MiB of f32-equivalent elements per input block: >=85% of HBM roofline on
# all generations while keeping f32 intermediates well under v7x's VMEM limit.
_TARGET_BLOCK_ELEMS = 512 * 1024


def _tv_loss_jnp(x: jax.Array, tv_loss_weight: float = 1.0) -> jax.Array:
    """Plain-XLA TV loss (reference, and fallback for oversized planes)."""
    n, c, h, w = x.shape
    xf = x.astype(jnp.float32)
    h_tv = jnp.sum((xf[:, :, 1:, :] - xf[:, :, :-1, :]) ** 2)
    w_tv = jnp.sum((xf[:, :, :, 1:] - xf[:, :, :, :-1]) ** 2)
    count_h = c * (h - 1) * w
    count_w = c * h * (w - 1)
    return tv_loss_weight * 2.0 * (h_tv / count_h + w_tv / count_w) / n


def _tv_block_kernel(masks_ref, x_ref, out_ref, *, w: int):
    """One block of tb flattened planes.

    masks_ref: (2, HW) f32 — row 0: vertical-pair validity (j < HW - w),
                              row 1: horizontal-pair validity (j % w != w - 1).
    x_ref:     (tb, HW) input planes (any float dtype).
    out_ref:   (1, 2, 128) — row 0 = h_tv partial, row 1 = w_tv partial
               (scalar broadcast across lanes; wrapper reads lane 0).
    """
    tb, hw = x_ref.shape
    x = x_ref[...].astype(jnp.float32)          # (tb, hw)

    mask_h = masks_ref[0:1, :]                  # (1, hw) f32 0/1
    mask_w = masks_ref[1:2, :]

    # Neighbour below (j + w) / to the right (j + 1) via a circular lane roll
    # (np.roll semantics, positive shift).  Wrapped positions are exactly the
    # masked-out ones, so no extra handling is needed.
    if hw > w:                                  # h > 1
        dh = pltpu.roll(x, shift=hw - w, axis=1) - x
    else:
        dh = jnp.zeros_like(x)
    if w > 1:
        dw = pltpu.roll(x, shift=hw - 1, axis=1) - x
    else:
        dw = jnp.zeros_like(x)

    if tb >= 32:
        # Reduce over the plane (sublane) axis on the MXU: ones @ sq gives the
        # per-position column sums; mask + tiny lane reduce finishes the job.
        ones_lhs = jnp.ones((8, tb), dtype=jnp.float32)
        cs_h = jnp.dot(ones_lhs, dh * dh, preferred_element_type=jnp.float32)
        cs_w = jnp.dot(ones_lhs, dw * dw, preferred_element_type=jnp.float32)
        s_h = jnp.sum(cs_h[0:1, :] * mask_h, keepdims=True)      # (1, 1)
        s_w = jnp.sum(cs_w[0:1, :] * mask_w, keepdims=True)
    else:
        # Small blocks: direct masked sum (MXU detour not worth it).
        s_h = jnp.sum(dh * dh * mask_h, keepdims=True)            # (1, 1)
        s_w = jnp.sum(dw * dw * mask_w, keepdims=True)

    out_ref[0, 0:1, :] = jnp.broadcast_to(s_h, (1, 128))
    out_ref[0, 1:2, :] = jnp.broadcast_to(s_w, (1, 128))


def tv_loss(x: jax.Array, tv_loss_weight: float = 1.0) -> jax.Array:
    """Total variation loss, matching PyTorch TVLoss.forward semantics (NCHW)."""
    n, c, h, w = x.shape
    planes = n * c
    hw = h * w

    # Planes too large for a whole-plane block: fall back to plain XLA.
    # TODO(synk): tile huge planes along H with a 1-row halo instead of falling back.
    if min(planes, 8) * hw > _TARGET_BLOCK_ELEMS:
        return _tv_loss_jnp(x, tv_loss_weight)

    # ---- choose planes-per-block (tb) -------------------------------------
    tb = min(planes, max(1, _TARGET_BLOCK_ELEMS // hw))
    if planes >= 16:
        tb = min(tb, (planes + 1) // 2)      # >=2 blocks -> use both v7x TensorCores
    if tb < planes:
        tb = max(8, (tb // 8) * 8)           # sublane-aligned partial tiling
    num_blocks = planes // tb
    planes_main = num_blocks * tb

    x_flat = x.reshape(planes, hw)           # free reshape, no copy

    # 0/1 masks over flattened positions j = r*w + col (built once, DMA'd once):
    #   row 0: vertical pair  (j, j+w) valid iff j <  hw - w
    #   row 1: horizontal pair (j, j+1) valid iff j % w != w - 1
    j = jnp.arange(hw, dtype=jnp.int32)
    masks = jnp.stack([
        (j < hw - w).astype(jnp.float32),
        ((j % w) != (w - 1)).astype(jnp.float32),
    ])                                        # (2, hw)

    partials = pl.pallas_call(
        functools.partial(_tv_block_kernel, w=w),
        out_shape=jax.ShapeDtypeStruct((num_blocks, 2, 128), jnp.float32),
        grid_spec=pltpu.PrefetchScalarGridSpec(
            num_scalar_prefetch=0,
            grid=(num_blocks,),
            in_specs=[
                pl.BlockSpec((2, hw), lambda i: (0, 0)),    # masks: constant block
                pl.BlockSpec((tb, hw), lambda i: (i, 0)),   # planes
            ],
            out_specs=pl.BlockSpec((1, 2, 128), lambda i: (i, 0, 0)),
        ),
        compiler_params=pltpu.CompilerParams(
            dimension_semantics=("parallel",),   # independent blocks, no carried state
            vmem_limit_bytes=32 * 1024 * 1024,
        ),
    )(masks, x_flat)

    h_tv = jnp.sum(partials[:, 0, 0])
    w_tv = jnp.sum(partials[:, 1, 0])

    # Leftover (< tb) planes: tiny plain-XLA epilogue instead of padding the
    # whole input (which would cost a full extra HBM pass).
    if planes_main < planes:
        xr = x_flat[planes_main:].astype(jnp.float32).reshape(-1, h, w)
        h_tv = h_tv + jnp.sum((xr[:, 1:, :] - xr[:, :-1, :]) ** 2)
        w_tv = w_tv + jnp.sum((xr[:, :, 1:] - xr[:, :, :-1]) ** 2)

    count_h = c * (h - 1) * w
    count_w = c * h * (w - 1)
    # NOTE: h == 1 or w == 1 divides by zero — same behavior as the PyTorch module.
    return tv_loss_weight * 2.0 * (h_tv / count_h + w_tv / count_w) / n


if __name__ == "__main__":
    key = jax.random.PRNGKey(0)
    x = jax.random.normal(key, (2, 4, 16, 16), dtype=jnp.float32)

    out = jax.block_until_ready(tv_loss(x, tv_loss_weight=1.0))
    ref = jax.block_until_ready(_tv_loss_jnp(x, tv_loss_weight=1.0))
    assert jnp.allclose(out, ref, rtol=1e-5, atol=1e-5), (out, ref)

    print("KERNEL_OK")
</pallas_src>

<mosaic_0001>
module attributes {stable_mosaic.version = 11 : i64} {
  func.func @_tv_block_kernel(%arg0: i32, %arg1: memref<2x256xf32, #tpu.memory_space<vmem>>, %arg2: memref<8x256xf32, #tpu.memory_space<vmem>>, %arg3: memref<1x2x128xf32, #tpu.memory_space<vmem>>) attributes {dimension_semantics = [#tpu.dimension_semantics<parallel>], iteration_bounds = array<i64: 1>, scalar_prefetch = 0 : i64, scratch_operands = 0 : i64, tpu.core_type = #tpu.core_type<tc>, window_params = [{pipeline_mode = #tpu.pipeline_mode<synchronous>, transform_indices = @transform_0, window_bounds = array<i64: 2, 256>}, {transform_indices = @transform_1, window_bounds = array<i64: 8, 256>}, {transform_indices = @transform_2, window_bounds = array<i64: 1, 2, 128>}]} {
    %c0 = arith.constant 0 : index
    %c0_0 = arith.constant 0 : index
    %0 = vector.load %arg2[%c0, %c0_0] : memref<8x256xf32, #tpu.memory_space<vmem>>, vector<8x256xf32>
    %c0_1 = arith.constant 0 : index
    %c0_2 = arith.constant 0 : index
    %1 = vector.load %arg1[%c0_1, %c0_2] : memref<2x256xf32, #tpu.memory_space<vmem>>, vector<1x256xf32>
    %c1 = arith.constant 1 : index
    %c0_3 = arith.constant 0 : index
    %2 = vector.load %arg1[%c1, %c0_3] : memref<2x256xf32, #tpu.memory_space<vmem>>, vector<1x256xf32>
    %c240_i32 = arith.constant 240 : i32
    %3 = tpu.dynamic_rotate %0 by %c240_i32 dim 1 : vector<8x256xf32>, i32 -> vector<8x256xf32>
    %4 = arith.subf %3, %0 : vector<8x256xf32>
    %c255_i32 = arith.constant 255 : i32
    %5 = tpu.dynamic_rotate %0 by %c255_i32 dim 1 : vector<8x256xf32>, i32 -> vector<8x256xf32>
    %6 = arith.subf %5, %0 : vector<8x256xf32>
    %7 = arith.mulf %4, %4 : vector<8x256xf32>
    %8 = vector.broadcast %1 : vector<1x256xf32> to vector<8x256xf32>
    %9 = arith.mulf %7, %8 : vector<8x256xf32>
    %10 = vector.shape_cast %9 : vector<8x256xf32> to vector<1x8x256xf32>
    %cst = arith.constant dense<0.000000e+00> : vector<1xf32>
    %11 = vector.multi_reduction <add>, %10, %cst [1, 2] : vector<1x8x256xf32> to vector<1xf32>
    %12 = vector.shape_cast %11 : vector<1xf32> to vector<1x1x1xf32>
    %13 = vector.extract %12[0, 0, 0] : f32 from vector<1x1x1xf32>
    %14 = vector.broadcast %13 : f32 to vector<1x1xf32>
    %15 = arith.mulf %6, %6 : vector<8x256xf32>
    %16 = vector.broadcast %2 : vector<1x256xf32> to vector<8x256xf32>
    %17 = arith.mulf %15, %16 : vector<8x256xf32>
    %18 = vector.shape_cast %17 : vector<8x256xf32> to vector<1x8x256xf32>
    %cst_4 = arith.constant dense<0.000000e+00> : vector<1xf32>
    %19 = vector.multi_reduction <add>, %18, %cst_4 [1, 2] : vector<1x8x256xf32> to vector<1xf32>
    %20 = vector.shape_cast %19 : vector<1xf32> to vector<1x1x1xf32>
    %21 = vector.extract %20[0, 0, 0] : f32 from vector<1x1x1xf32>
    %22 = vector.broadcast %21 : f32 to vector<1x1xf32>
    %23 = vector.shape_cast %14 : vector<1x1xf32> to vector<1x1xf32>
    %24 = vector.broadcast %23 : vector<1x1xf32> to vector<1x128xf32>
    %c0_5 = arith.constant 0 : index
    %c0_6 = arith.constant 0 : index
    %c0_7 = arith.constant 0 : index
    %25 = vector.load %arg3[%c0_5, %c0_6, %c0_7] : memref<1x2x128xf32, #tpu.memory_space<vmem>>, vector<1x1x128xf32>
    %26 = vector.shape_cast %25 : vector<1x1x128xf32> to vector<1x128xf32>
    %27 = vector.shape_cast %24 : vector<1x128xf32> to vector<1x1x128xf32>
    tpu.vector_store %arg3[%c0_5, %c0_6, %c0_7], %27 {strides = array<i32>} : memref<1x2x128xf32, #tpu.memory_space<vmem>>, vector<1x1x128xf32>,
    %28 = vector.shape_cast %22 : vector<1x1xf32> to vector<1x1xf32>
    %29 = vector.broadcast %28 : vector<1x1xf32> to vector<1x128xf32>
    %c0_8 = arith.constant 0 : index
    %c1_9 = arith.constant 1 : index
    %c0_10 = arith.constant 0 : index
    %30 = vector.load %arg3[%c0_8, %c1_9, %c0_10] : memref<1x2x128xf32, #tpu.memory_space<vmem>>, vector<1x1x128xf32>
    %31 = vector.shape_cast %30 : vector<1x1x128xf32> to vector<1x128xf32>
    %32 = vector.shape_cast %29 : vector<1x128xf32> to vector<1x1x128xf32>
    tpu.vector_store %arg3[%c0_8, %c1_9, %c0_10], %32 {strides = array<i32>} : memref<1x2x128xf32, #tpu.memory_space<vmem>>, vector<1x1x128xf32>,
    return
  }
  func.func @transform_0(%arg0: i32) -> (i32, i32) {
    %c0_i32 = arith.constant 0 : i32
    %c0_i32_0 = arith.constant 0 : i32
    %c0_i32_1 = arith.constant 0 : i32
    return %c0_i32, %c0_i32_0 : i32, i32
  }
  func.func @transform_1(%arg0: i32) -> (i32, i32) {
    %c0_i32 = arith.constant 0 : i32
    %c0_i32_0 = arith.constant 0 : i32
    return %arg0, %c0_i32 : i32, i32
  }
  func.func @transform_2(%arg0: i32) -> (i32, i32, i32) {
    %c0_i32 = arith.constant 0 : i32
    %c0_i32_0 = arith.constant 0 : i32
    %c0_i32_1 = arith.constant 0 : i32
    return %arg0, %c0_i32, %c0_i32_0 : i32, i32, i32
  }
}

</mosaic_0001>

<llo_original>
// kernel: tpu_custom_call.1
$region0: #{tpu_custom_call.1}
  #allocation0 [shape = 'u32[]', space=smem, size = 0x4, offset = 0x4, fixed_abs, tag = 'smem constant byte address 0x4 - core index']
  #allocation1 [shape = 'u32[144,128]{1,0:T(1,128)}', space=vmem, size = 0x12000, scoped, tag = 'internal scratch']
  %s0 = inlined_call_operand.hbm [shape: f32[2,256], index: 0, kind: input, shape index: {}]
  %s1 = inlined_call_operand.hbm [shape: f32[8,256], index: 1, kind: input, shape index: {}]
  %s2 = inlined_call_operand.hbm [shape: f32[1,2,128], index: 2, kind: output, shape index: {}]
  %s3 = sld [smem:[#allocation0]]
  $region26: #{tpu_custom_call.1} parent=0
    _
  %s5 = ssub.s32 1, %s3
  %s6 = scalar_select 0, %s5, %s3
  $region1: #{tpu_custom_call.1} parent=0
    #allocation2 [shape = 'u8[2048]{0}', space=vmem, size = 0x800, scoped, tag = 'input window, operand 0, single buffered']
    #allocation3 [shape = 's32[1]{0}', space=sflag, size = 0x4, scoped, tag = 'scoped memory for tpu_custom_call.1']
    #allocation4 [shape = 's32[1]{0}', space=sflag, size = 0x4, scoped, tag = 'scoped memory for tpu_custom_call.1']
    #allocation5 [shape = 'u8[8192]{0}', space=vmem, size = 0x2000, scoped, tag = 'input window, operand 1, single buffered']
    #allocation6 [shape = 's32[1]{0}', space=sflag, size = 0x4, scoped, tag = 'scoped memory for tpu_custom_call.1']
    #allocation7 [shape = 'u8[1024]{0}', space=vmem, size = 0x400, scoped, tag = 'output window, operand 0, single buffered']
    %7 = vsyncpa [#allocation3], 0
    %8 = vsyncpa [#allocation6], 0
    %9 = vsyncpa [#allocation4], 0
    // Predicated region
    $region2: #{tpu_custom_call.1} parent=1 // pred_check
      _
    $region3: #{tpu_custom_call.1} parent=1 // pred_check_branch
      %11 = sbr.rel (0) target = $region5
    $region4: #{tpu_custom_call.1} parent=1 // pred_region
      %s13 = ssub.s32 64, 64
      %14 = vsyncadd [#allocation3], %s13
      %s16 = sshll.u32 [#allocation2], 4
      %s17 = int_to_ptr.vmem [resolvable:$true] %s16
      %19 = dma.hbm_to_vmem [thread:$0]  %s0, 64, %s17, [#allocation3]
    $region5: #{tpu_custom_call.1} parent=1 // pred_fallthru
      _
    // Predicated region
    $region6: #{tpu_custom_call.1} parent=1 // pred_check
      _
    $region7: #{tpu_custom_call.1} parent=1 // pred_check_branch
      %21 = sbr.rel (0) target = $region9
    $region8: #{tpu_custom_call.1} parent=1 // pred_region
      %s23 = ssub.s32 256, 256
      %24 = vsyncadd [#allocation6], %s23
      %s26 = sshll.u32 [#allocation5], 4
      %s27 = int_to_ptr.vmem [resolvable:$true] %s26
      %29 = dma.hbm_to_vmem [thread:$0]  %s1, 256, %s27, [#allocation6]
    $region9: #{tpu_custom_call.1} parent=1 // pred_fallthru
      _
    // Predicated region
    $region10: #{tpu_custom_call.1} parent=1 // pred_check
      _
    $region11: #{tpu_custom_call.1} parent=1 // pred_check_branch
      %31 = sbr.rel (0) target = $region13
    $region12: #{tpu_custom_call.1} parent=1 // pred_region
      %32 = dma.done [#allocation3], 64
    $region13: #{tpu_custom_call.1} parent=1 // pred_fallthru
      _
    // Predicated region
    $region14: #{tpu_custom_call.1} parent=1 // pred_check
      _
    $region15: #{tpu_custom_call.1} parent=1 // pred_check_branch
      %34 = sbr.rel (0) target = $region17
    $region16: #{tpu_custom_call.1} parent=1 // pred_region
      %35 = dma.done [#allocation6], 256
    $region17: #{tpu_custom_call.1} parent=1 // pred_fallthru
      _
    %v36 = vld [vmem:[#allocation5] sm:$0xff]
    %v37 = vld [vmem:[#allocation5 + $0x8] sm:$0xff]
    %v38 = vld [vmem:[#allocation2] ss:$2 sm:$0x3]
    %s39 = scalar_lea.vmem [#allocation2], 1
    %v40 = vld [vmem:[%s39] ss:$2 sm:$0x3]
    %41 = vrot.lane.b32.xlu0 %v36, 112
    %v42 = vpop.permute.xlu0 %41
    %43 = vrot.lane.b32.xlu0 %v37, 112
    %v44 = vpop.permute.xlu0 %43
    %v45 = vlaneseq
    %v46 = vand.u32 %v45, 127
    %vm47 = vcmp.lt.s32.totalorder %v46, 112
    %v48 = vsel %vm47, %v42, %v44
    %v49 = vsel %vm47, %v44, %v42
    %v50 = vsub.f32 %v48, %v36
    %v51 = vsub.f32 %v49, %v37
    %52 = vrot.lane.b32.xlu0 %v36, 127
    %v53 = vpop.permute.xlu0 %52
    %54 = vrot.lane.b32.xlu0 %v37, 127
    %v55 = vpop.permute.xlu0 %54
    %vm56 = vcmp.lt.s32.totalorder %v46, 127
    %v57 = vsel %vm56, %v53, %v55
    %v58 = vsel %vm56, %v55, %v53
    %v59 = vsub.f32 %v57, %v36
    %v60 = vsub.f32 %v58, %v37
    %v61 = vmul.f32 %v50, %v50
    %v62 = vmul.f32 %v51, %v51
    %v64 = vlaneseq
    %v65 = vshrl.u32 %v64, 7
    %v66 = vsub.s32 0, %v65
    %v67 = vrot.slane %v38, %v66
    %v68 = vlaneseq
    %v69 = vshrl.u32 %v68, 7
    %v70 = vsub.s32 1, %v69
    %v71 = vrot.slane %v38, %v70
    %v74 = vmul.f32 %v61, %v67
    %v75 = vmul.f32 %v62, %v71
    %v76 = vadd.f32 %v74, %v75
    %77 = vadd.xlane.f32.xlu0 %v76
    %v78 = vpop.xlane.xlu0 %77
    %v79 = vrot.slane %v78, 4
    %v80 = vadd.f32 %v78, %v79
    %v81 = vrot.slane %v80, 2
    %v82 = vadd.f32 %v80, %v81
    %v83 = vrot.slane %v82, 1
    %v84 = vadd.f32 %v82, %v83
    %s85 = vtos %v84
    %v86 = vmul.f32 %v59, %v59
    %v87 = vmul.f32 %v60, %v60
    %v89 = vlaneseq
    %v90 = vshrl.u32 %v89, 7
    %v91 = vsub.s32 0, %v90
    %v92 = vrot.slane %v40, %v91
    %v93 = vlaneseq
    %v94 = vshrl.u32 %v93, 7
    %v95 = vsub.s32 1, %v94
    %v96 = vrot.slane %v40, %v95
    %v99 = vmul.f32 %v86, %v92
    %v100 = vmul.f32 %v87, %v96
    %v101 = vadd.f32 %v99, %v100
    %102 = vadd.xlane.f32.xlu0 %v101
    %v103 = vpop.xlane.xlu0 %102
    %v104 = vrot.slane %v103, 4
    %v105 = vadd.f32 %v103, %v104
    %v106 = vrot.slane %v105, 2
    %v107 = vadd.f32 %v105, %v106
    %v108 = vrot.slane %v107, 1
    %v109 = vadd.f32 %v107, %v108
    %s110 = vtos %v109
    %v111 = vstv %s85
    %112 = vst [vmem:[#allocation7] sm:$0x1] %v111
    %v113 = vstv %s110
    %114 = vst [vmem:[#allocation7 + $0x1] sm:$0x1] %v113
    // Predicated region
    $region18: #{tpu_custom_call.1} parent=1 // pred_check
      _
    $region19: #{tpu_custom_call.1} parent=1 // pred_check_branch
      %116 = sbr.rel (0) target = $region21
    $region20: #{tpu_custom_call.1} parent=1 // pred_region
      %s118 = ssub.s32 32, 32
      %119 = vsyncadd [#allocation4], %s118
      %s121 = sshll.u32 [#allocation7], 4
      %s122 = int_to_ptr.vmem [resolvable:$true] %s121
      %124 = dma.vmem_to_hbm [thread:$0]  %s122, 32, %s2, [#allocation4]
    $region21: #{tpu_custom_call.1} parent=1 // pred_fallthru
      _
    // Predicated region
    $region22: #{tpu_custom_call.1} parent=1 // pred_check
      _
    $region23: #{tpu_custom_call.1} parent=1 // pred_check_branch
      %126 = sbr.rel (0) target = $region25
    $region24: #{tpu_custom_call.1} parent=1 // pred_region
      %127 = dma.done [#allocation4], 32
    $region25: #{tpu_custom_call.1} parent=1 // pred_fallthru
      _
    %128 = vsyncpa [#allocation3], 1
    %129 = vsyncpa [#allocation6], 1
    %130 = vsyncpa [#allocation4], 1

</llo_original>
